<compile_context>
chip_gen: v7x
topology: tpu7x:2x2x1
jax: 0.10.0
libtpu: 0.0.40
codegen_flags: <defaults>
</compile_context>

<pallas_src>
import functools

import jax
import jax.numpy as jnp
from jax.experimental import pallas as pl
from jax.experimental.pallas import tpu as pltpu


def _round_up(v, m):
    return ((v + m - 1) // m) * m


def _cdiv(a, b):
    return (a + b - 1) // b


def _fused_parallel_linear_kernel(x_ref, w_ref, b_ref, o_ref, acc_ref, *, tk):
    # x_ref:   [tm, k_pad]  resident x slab for this m-tile (compute dtype)
    # w_ref:   [tk, tn]     pre-transposed [in, out] weight tile (compute dtype)
    # b_ref:   [1, tn]      fused bias tile (f32)
    # o_ref:   [tm, tn]     output tile (out dtype), resident across k
    # acc_ref: [tm, tn]     f32 scratch accumulator
    k = pl.program_id(2)

    @pl.when(k == 0)
    def _init():
        acc_ref[...] = jnp.zeros_like(acc_ref)

    # Slice the resident x slab at this k-chunk (aligned, lane-dense).
    k_start = pl.multiple_of(k * tk, 128)
    x_blk = x_ref[:, pl.ds(k_start, tk)]

    # Standard ((1,),(0,)) contraction on the MXU, f32 accumulate.
    acc_ref[...] += jnp.dot(x_blk, w_ref[...],
                            preferred_element_type=jnp.float32)

    @pl.when(k == pl.num_programs(2) - 1)
    def _finalize():
        o_ref[...] = (acc_ref[...] + b_ref[...]).astype(o_ref.dtype)


def prepare_parallel_linear_params(weights, biases, *,
                                   compute_dtype=jnp.bfloat16,
                                   tn_max=2048, tk_max=2048):
    """One-time (init) weight/bias preparation for the fused kernel.

    Args:
      weights: [F, H_out, H_in] float32 (PyTorch Linear layout, [out, in])
      biases:  [F, H_out]       float32
      compute_dtype: MXU input dtype (bf16 default; pass jnp.float32 for
        exact f32 nn.Linear semantics).

    Returns dict of padded/cast parameters + tiling metadata.
    """
    F, H_out, H_in = weights.shape
    N_total = F * H_out
    w_bytes = jnp.dtype(compute_dtype).itemsize

    # Lane-dense tiles, multiples of 128 (256-aligned at the defaults for the
    # v6e/v7x 256x256 MXU), capped for VMEM.
    tn = min(tn_max, _round_up(N_total, 128))
    tk = min(tk_max, _round_up(H_in, 128))

    # v7x megacore: prefer >= 2 tiles on the parallel N axis so both
    # TensorCores get work (no-op when N is small).
    while tn > 256 and _cdiv(N_total, tn) < 2:
        tn = max(256, _round_up(tn // 2, 128))

    # Keep the double-buffered weight tile within budget (only triggers for
    # non-default dtypes / tile caps).
    W_TILE_BUDGET = 24 * 1024 * 1024
    while tk > 256 and 2 * tn * tk * w_bytes > W_TILE_BUDGET:
        tk = max(256, _round_up(tk // 2, 128))

    n_pad = _round_up(N_total, tn)
    k_pad = _round_up(H_in, tk)

    # Branches concatenated along the output axis, then a ONE-TIME transpose
    # to [H_in, N_total] so the kernel needs no per-tile XLU transpose.
    # Pad + cast happen here (init), never on the forward path.
    w_all = weights.reshape(N_total, H_in).T                      # [H_in, N]
    w_p = jnp.pad(w_all, ((0, k_pad - H_in), (0, n_pad - N_total)))
    w_p = w_p.astype(compute_dtype)                               # [k_pad, n_pad]
    b_p = jnp.pad(biases.reshape(N_total), (0, n_pad - N_total))
    b_p = b_p.reshape(1, n_pad).astype(jnp.float32)

    return dict(w=w_p, b=b_p, F=F, H_out=H_out, H_in=H_in, N_total=N_total,
                n_pad=n_pad, k_pad=k_pad, tn=tn, tk=tk,
                compute_dtype=compute_dtype)


def parallel_modules_forward(x, params, *, tm_max=256):
    """Apply F parallel Linear branches to the same x with one fused kernel.

    Args:
      x:      [B, H_in] float32
      params: output of prepare_parallel_linear_params

    Returns:
      Stacked array [F, B, H_out]; row f is branch f's output
      (== list(map(fn_f, x)) stacked, same forward semantics).
    """
    F, H_out, H_in = params["F"], params["H_out"], params["H_in"]
    N_total, n_pad, k_pad = params["N_total"], params["n_pad"], params["k_pad"]
    tn, tk = params["tn"], params["tk"]
    w_p, b_p = params["w"], params["b"]
    compute_dtype = params["compute_dtype"]
    x_bytes = jnp.dtype(compute_dtype).itemsize

    B, K = x.shape
    assert K == H_in
    out_dtype = x.dtype

    # Batch padded to 16 (bf16 packs 16 rows per sublane group) and tiled.
    b_pad16 = _round_up(B, 16)
    tm = min(tm_max, b_pad16)
    tm = _round_up(tm, 16)
    # Keep the resident x slab [tm, k_pad] within a per-buffer budget.
    X_BLOCK_BUDGET = 8 * 1024 * 1024
    while tm > 16 and tm * k_pad * x_bytes > X_BLOCK_BUDGET:
        tm = max(16, _round_up(tm // 2, 16))
    b_pad = _round_up(b_pad16, tm)

    # Activation-side pad/cast only (weights were prepared at init).
    x_p = jnp.pad(x, ((0, b_pad - B), (0, k_pad - K))).astype(compute_dtype)

    grid = (b_pad // tm, n_pad // tn, k_pad // tk)   # reduction (k) axis last

    kernel = functools.partial(_fused_parallel_linear_kernel, tk=tk)

    out = pl.pallas_call(
        kernel,
        out_shape=jax.ShapeDtypeStruct((b_pad, n_pad), out_dtype),
        grid_spec=pltpu.PrefetchScalarGridSpec(
            num_scalar_prefetch=0,
            grid=grid,
            in_specs=[
                # x slab resident per m-tile (fetched once per m, not per n,k).
                pl.BlockSpec((tm, k_pad), lambda m, n, k: (m, 0)),
                # Pre-transposed weight tile [tk, tn].
                pl.BlockSpec((tk, tn), lambda m, n, k: (k, n)),
                # Bias tile.
                pl.BlockSpec((1, tn), lambda m, n, k: (0, n)),
            ],
            out_specs=pl.BlockSpec((tm, tn), lambda m, n, k: (m, n)),
            scratch_shapes=[pltpu.VMEM((tm, tn), jnp.float32)],
        ),
        compiler_params=pltpu.CompilerParams(
            dimension_semantics=("parallel", "parallel", "arbitrary"),
            # 48 MiB leaves headroom on v7x's 64 MiB physical VMEM while
            # allowing the 2048-wide tiles; v5e/v6e (128 MiB) could go higher.
            vmem_limit_bytes=48 * 1024 * 1024,
        ),
    )(x_p, w_p, b_p)

    # Strip padding and split branches with one reshape/moveaxis
    # (no F separate slice dispatches).
    y = out[:B, :N_total].reshape(B, F, H_out)
    return jnp.moveaxis(y, 1, 0)   # [F, B, H_out]


if __name__ == "__main__":
    key = jax.random.PRNGKey(0)
    B, H = 8, 32          # seq=8, hidden=32
    F = 3                 # number of parallel branches (submodules)

    kx, kw, kb = jax.random.split(key, 3)
    x = jax.random.normal(kx, (B, H), dtype=jnp.float32)
    # Deterministic Linear parameters (PyTorch layout: weight [out, in]).
    weights = jax.random.normal(kw, (F, H, H), dtype=jnp.float32) * 0.1
    biases = jax.random.normal(kb, (F, H), dtype=jnp.float32) * 0.1

    # Init-time weight prep, forward-time kernel call.
    params = prepare_parallel_linear_params(weights, biases)
    outs = parallel_modules_forward(x, params)
    outs = jax.block_until_ready(outs)
    assert outs.shape == (F, B, H), outs.shape

    # Reference 1: same bf16 quantization of x/W as the kernel, f32 math.
    xq = x.astype(jnp.bfloat16).astype(jnp.float32)
    wq = weights.astype(jnp.bfloat16).astype(jnp.float32)
    for f in range(F):
        ref = xq @ wq[f].T + biases[f]
        assert jnp.allclose(outs[f], ref, atol=1e-3, rtol=1e-3), f

    # Reference 2: pure-f32 torch.nn.Linear semantics (looser tol for bf16).
    for f in range(F):
        ref = x @ weights[f].T + biases[f]
        assert jnp.allclose(outs[f], ref, atol=5e-2, rtol=5e-2), f

    print("KERNEL_OK")
</pallas_src>

<mosaic_0001>
module attributes {stable_mosaic.version = 11 : i64} {
  func.func @_fused_parallel_linear_kernel(%arg0: i32, %arg1: i32, %arg2: i32, %arg3: memref<16x128xbf16, #tpu.memory_space<vmem>>, %arg4: memref<128x128xbf16, #tpu.memory_space<vmem>>, %arg5: memref<1x128xf32, #tpu.memory_space<vmem>>, %arg6: memref<16x128xf32, #tpu.memory_space<vmem>>, %arg7: memref<16x128xf32, #tpu.memory_space<vmem>>) attributes {dimension_semantics = [#tpu.dimension_semantics<parallel>, #tpu.dimension_semantics<parallel>, #tpu.dimension_semantics<arbitrary>], iteration_bounds = array<i64: 1, 1, 1>, scalar_prefetch = 0 : i64, scratch_operands = 1 : i64, tpu.core_type = #tpu.core_type<tc>, window_params = [{transform_indices = @transform_0, window_bounds = array<i64: 16, 128>}, {transform_indices = @transform_1, window_bounds = array<i64: 128, 128>}, {transform_indices = @transform_2, window_bounds = array<i64: 1, 128>}, {transform_indices = @transform_3, window_bounds = array<i64: 16, 128>}]} {
    %c0_i32 = arith.constant 0 : i32
    %0 = arith.cmpi eq, %arg2, %c0_i32 : i32
    %1 = arith.extui %0 : i1 to i32
    %c0_i32_0 = arith.constant 0 : i32
    %2 = arith.cmpi ne, %1, %c0_i32_0 : i32
    scf.if %2 {
      %cst_9 = arith.constant 0.000000e+00 : f32
      %15 = vector.broadcast %cst_9 : f32 to vector<16x128xf32>
      %c0_10 = arith.constant 0 : index
      %c0_11 = arith.constant 0 : index
      %16 = vector.load %arg7[%c0_10, %c0_11] : memref<16x128xf32, #tpu.memory_space<vmem>>, vector<16x128xf32>
      tpu.vector_store %arg7[%c0_10, %c0_11], %15 {strides = array<i32>} : memref<16x128xf32, #tpu.memory_space<vmem>>, vector<16x128xf32>,
    } else {
    }
    %c128_i32 = arith.constant 128 : i32
    %3 = arith.muli %arg2, %c128_i32 : i32
    %4 = tpu.assume_multiple %3, 128 : i32
    %c0 = arith.constant 0 : index
    %5 = arith.index_cast %4 : i32 to index
    %6 = vector.load %arg3[%c0, %5] : memref<16x128xbf16, #tpu.memory_space<vmem>>, vector<16x128xbf16>
    %c0_1 = arith.constant 0 : index
    %c0_2 = arith.constant 0 : index
    %7 = vector.load %arg7[%c0_1, %c0_2] : memref<16x128xf32, #tpu.memory_space<vmem>>, vector<16x128xf32>
    %c0_3 = arith.constant 0 : index
    %c0_4 = arith.constant 0 : index
    %8 = vector.load %arg4[%c0_3, %c0_4] : memref<128x128xbf16, #tpu.memory_space<vmem>>, vector<128x128xbf16>
    %cst = arith.constant dense<0.000000e+00> : vector<16x128xf32>
    %9 = tpu.matmul %6, %8, %cst {dimension_numbers = #tpu.dot_dimension_numbers<[1], [0], [0], [1], [0, 0, 1, 1], [], []>} : vector<16x128xbf16>, vector<128x128xbf16>, vector<16x128xf32> -> vector<16x128xf32>
    %10 = arith.addf %7, %9 : vector<16x128xf32>
    %c0_5 = arith.constant 0 : index
    %c0_6 = arith.constant 0 : index
    %11 = vector.load %arg7[%c0_5, %c0_6] : memref<16x128xf32, #tpu.memory_space<vmem>>, vector<16x128xf32>
    tpu.vector_store %arg7[%c0_5, %c0_6], %10 {strides = array<i32>} : memref<16x128xf32, #tpu.memory_space<vmem>>, vector<16x128xf32>,
    %c0_i32_7 = arith.constant 0 : i32
    %12 = arith.cmpi eq, %arg2, %c0_i32_7 : i32
    %13 = arith.extui %12 : i1 to i32
    %c0_i32_8 = arith.constant 0 : i32
    %14 = arith.cmpi ne, %13, %c0_i32_8 : i32
    scf.if %14 {
      %c0_9 = arith.constant 0 : index
      %c0_10 = arith.constant 0 : index
      %15 = vector.load %arg7[%c0_9, %c0_10] : memref<16x128xf32, #tpu.memory_space<vmem>>, vector<16x128xf32>
      %c0_11 = arith.constant 0 : index
      %c0_12 = arith.constant 0 : index
      %16 = vector.load %arg5[%c0_11, %c0_12] : memref<1x128xf32, #tpu.memory_space<vmem>>, vector<1x128xf32>
      %17 = vector.broadcast %16 : vector<1x128xf32> to vector<16x128xf32>
      %18 = arith.addf %15, %17 : vector<16x128xf32>
      %c0_13 = arith.constant 0 : index
      %c0_14 = arith.constant 0 : index
      %19 = vector.load %arg6[%c0_13, %c0_14] : memref<16x128xf32, #tpu.memory_space<vmem>>, vector<16x128xf32>
      tpu.vector_store %arg6[%c0_13, %c0_14], %18 {strides = array<i32>} : memref<16x128xf32, #tpu.memory_space<vmem>>, vector<16x128xf32>,
    } else {
    }
    return
  }
  func.func @transform_0(%arg0: i32, %arg1: i32, %arg2: i32) -> (i32, i32) {
    %c0_i32 = arith.constant 0 : i32
    %c0_i32_0 = arith.constant 0 : i32
    return %arg0, %c0_i32 : i32, i32
  }
  func.func @transform_1(%arg0: i32, %arg1: i32, %arg2: i32) -> (i32, i32) {
    %c0_i32 = arith.constant 0 : i32
    return %arg2, %arg1 : i32, i32
  }
  func.func @transform_2(%arg0: i32, %arg1: i32, %arg2: i32) -> (i32, i32) {
    %c0_i32 = arith.constant 0 : i32
    %c0_i32_0 = arith.constant 0 : i32
    return %c0_i32, %arg1 : i32, i32
  }
  func.func @transform_3(%arg0: i32, %arg1: i32, %arg2: i32) -> (i32, i32) {
    %c0_i32 = arith.constant 0 : i32
    return %arg0, %arg1 : i32, i32
  }
}

</mosaic_0001>

<llo_original>
// kernel: tpu_custom_call.1
$region0: #{tpu_custom_call.1}
  #allocation0 [shape = 'u32[]', space=smem, size = 0x4, offset = 0x4, fixed_abs, tag = 'smem constant byte address 0x4 - core index']
  #allocation1 [shape = 'u32[144,128]{1,0:T(1,128)}', space=vmem, size = 0x12000, scoped, tag = 'internal scratch']
  #allocation2 [shape = 'f32[16,128]{1,0:T(8,128)}', space=vmem, size = 0x2000, scoped, tag = 'scratch operand']
  %s0 = inlined_call_operand.hbm [shape: bf16[16,128], index: 0, kind: input, shape index: {}]
  %s1 = inlined_call_operand.hbm [shape: bf16[128,128], index: 1, kind: input, shape index: {}]
  %s2 = inlined_call_operand.vmem [shape: f32[1,128], index: 2, kind: input, shape index: {}]
  %s3 = inlined_call_operand.hbm [shape: f32[16,128], index: 3, kind: output, shape index: {}]
  %s4 = sld [smem:[#allocation0]]
  $region38: #{tpu_custom_call.1} parent=0
    _
  %s6 = ssub.s32 1, %s4
  %s7 = scalar_select 0, %s6, %s4
  $region1: #{tpu_custom_call.1} parent=0
    #allocation3 [shape = 'u8[4096]{0}', space=vmem, size = 0x1000, scoped, tag = 'input window, operand 0, single buffered']
    #allocation4 [shape = 's32[1]{0}', space=sflag, size = 0x4, scoped, tag = 'scoped memory for tpu_custom_call.1']
    #allocation5 [shape = 's32[1]{0}', space=sflag, size = 0x4, scoped, tag = 'scoped memory for tpu_custom_call.1']
    #allocation6 [shape = 'u8[32768]{0}', space=vmem, size = 0x8000, scoped, tag = 'input window, operand 1, single buffered']
    #allocation7 [shape = 's32[1]{0}', space=sflag, size = 0x4, scoped, tag = 'scoped memory for tpu_custom_call.1']
    #allocation8 [shape = 'u8[8192]{0}', space=vmem, size = 0x2000, scoped, tag = 'output window, operand 0, single buffered']
    %8 = vsyncpa [#allocation4], 0
    %9 = vsyncpa [#allocation7], 0
    %10 = vsyncpa [#allocation5], 0
    // Predicated region
    $region2: #{tpu_custom_call.1} parent=1 // pred_check
      _
    $region3: #{tpu_custom_call.1} parent=1 // pred_check_branch
      %12 = sbr.rel (0) target = $region5
    $region4: #{tpu_custom_call.1} parent=1 // pred_region
      %s14 = ssub.s32 128, 128
      %15 = vsyncadd [#allocation4], %s14
      %s16 = sshll.u32 [#allocation3], 4
      %s17 = int_to_ptr.vmem [resolvable:$true] %s16
      %22 = dma.hbm_to_vmem [thread:$0]  %s0, 128, %s17, [#allocation4], 64, 64, 4
    $region5: #{tpu_custom_call.1} parent=1 // pred_fallthru
      _
    // Predicated region
    $region6: #{tpu_custom_call.1} parent=1 // pred_check
      _
    $region7: #{tpu_custom_call.1} parent=1 // pred_check_branch
      %24 = sbr.rel (0) target = $region9
    $region8: #{tpu_custom_call.1} parent=1 // pred_region
      %s26 = ssub.s32 1024, 1024
      %27 = vsyncadd [#allocation7], %s26
      %s28 = sshll.u32 [#allocation6], 4
      %s29 = int_to_ptr.vmem [resolvable:$true] %s28
      %34 = dma.hbm_to_vmem [thread:$0]  %s1, 1024, %s29, [#allocation7], 64, 64, 4
    $region9: #{tpu_custom_call.1} parent=1 // pred_fallthru
      _
    // Predicated region
    $region10: #{tpu_custom_call.1} parent=1 // pred_check
      _
    $region11: #{tpu_custom_call.1} parent=1 // pred_check_branch
      %36 = sbr.rel (0) target = $region13
    $region12: #{tpu_custom_call.1} parent=1 // pred_region
      _
    $region13: #{tpu_custom_call.1} parent=1 // pred_fallthru
      _
    // Predicated region
    $region14: #{tpu_custom_call.1} parent=1 // pred_check
      _
    $region15: #{tpu_custom_call.1} parent=1 // pred_check_branch
      %38 = sbr.rel (0) target = $region17
    $region16: #{tpu_custom_call.1} parent=1 // pred_region
      %39 = dma.done [#allocation4], 128
    $region17: #{tpu_custom_call.1} parent=1 // pred_fallthru
      _
    // Predicated region
    $region18: #{tpu_custom_call.1} parent=1 // pred_check
      _
    $region19: #{tpu_custom_call.1} parent=1 // pred_check_branch
      %41 = sbr.rel (0) target = $region21
    $region20: #{tpu_custom_call.1} parent=1 // pred_region
      %42 = dma.done [#allocation7], 1024
    $region21: #{tpu_custom_call.1} parent=1 // pred_fallthru
      _
    %p44 = scmp.eq.s32.totalorder 0, 0
    // Predicated region
    $region22: #{tpu_custom_call.1} parent=1 // pred_check
      %p45 = pneg %p44
    $region23: #{tpu_custom_call.1} parent=1 // pred_check_branch
      %47 = sbr.rel (%p45) target = $region25
    $region24: #{tpu_custom_call.1} parent=1 // pred_region
      %48 = vst [vmem:[#allocation2] sm:$0xff] 0.0
      %49 = vst [vmem:[#allocation2 + $0x8] sm:$0xff] 0.0
    $region25: #{tpu_custom_call.1} parent=1 // pred_fallthru
      _
    %s50 = smul.u32 0, 128
    %s51 = sshra.s32 %s50, 7
    %s52 = sand.u32 %s50, 127
    %s53 = smul.addr %s51, 4
    %s54 = scalar_lea.vmem [#allocation3], %s53
    %v55 = vld [vmem:[%s54] sm:$0xf]
    %v56 = vld [vmem:[%s54 + $0x4] sm:$0xf]
    %v57 = vld [vmem:[#allocation2] sm:$0xff]
    %v58 = vld [vmem:[#allocation2 + $0x8] sm:$0xff]
    %v59 = vld [vmem:[#allocation6] sm:$0xf]
    %v60 = vld [vmem:[#allocation6 + $0x4] sm:$0xf]
    %v61 = vld [vmem:[#allocation6 + $0x8] sm:$0xf]
    %v62 = vld [vmem:[#allocation6 + $0xc] sm:$0xf]
    %v63 = vld [vmem:[#allocation6 + $0x10] sm:$0xf]
    %v64 = vld [vmem:[#allocation6 + $0x14] sm:$0xf]
    %v65 = vld [vmem:[#allocation6 + $0x18] sm:$0xf]
    %v66 = vld [vmem:[#allocation6 + $0x1c] sm:$0xf]
    %v67 = vld [vmem:[#allocation6 + $0x20] sm:$0xf]
    %v68 = vld [vmem:[#allocation6 + $0x24] sm:$0xf]
    %v69 = vld [vmem:[#allocation6 + $0x28] sm:$0xf]
    %v70 = vld [vmem:[#allocation6 + $0x2c] sm:$0xf]
    %v71 = vld [vmem:[#allocation6 + $0x30] sm:$0xf]
    %v72 = vld [vmem:[#allocation6 + $0x34] sm:$0xf]
    %v73 = vld [vmem:[#allocation6 + $0x38] sm:$0xf]
    %v74 = vld [vmem:[#allocation6 + $0x3c] sm:$0xf]
    %v77 = vunpack.c.l.b16 %v55
    %v78 = vunpack.c.l.b16 %v56
    %v79 = vpack.c.b16 %v78, %v77
    %v97 = vunpack.c.l.b16 %v59
    %v98 = vunpack.c.l.b16 %v60
    %v99 = vunpack.c.l.b16 %v61
    %v100 = vunpack.c.l.b16 %v62
    %v101 = vunpack.c.l.b16 %v63
    %v102 = vunpack.c.l.b16 %v64
    %v103 = vunpack.c.l.b16 %v65
    %v104 = vunpack.c.l.b16 %v66
    %v105 = vunpack.c.l.b16 %v67
    %v106 = vunpack.c.l.b16 %v68
    %v107 = vunpack.c.l.b16 %v69
    %v108 = vunpack.c.l.b16 %v70
    %v109 = vunpack.c.l.b16 %v71
    %v110 = vunpack.c.l.b16 %v72
    %v111 = vunpack.c.l.b16 %v73
    %v112 = vunpack.c.l.b16 %v74
    %v113 = vpack.c.b16 %v98, %v97
    %v114 = vpack.c.b16 %v100, %v99
    %v115 = vpack.c.b16 %v102, %v101
    %v116 = vpack.c.b16 %v104, %v103
    %v117 = vpack.c.b16 %v106, %v105
    %v118 = vpack.c.b16 %v108, %v107
    %v119 = vpack.c.b16 %v110, %v109
    %v120 = vpack.c.b16 %v112, %v111
    %129 = vmatprep.subr.bf16.mxu0 0
    %130 = vmatpush1.bf16.msra.mxu0 %v113
    %131 = vmatprep.subr.bf16.mxu0 0
    %132 = vmatpush1.bf16.msra.mxu0 %v114
    %133 = vmatprep.subr.bf16.mxu0 0
    %134 = vmatpush1.bf16.msra.mxu0 %v115
    %135 = vmatprep.subr.bf16.mxu0 0
    %136 = vmatpush1.bf16.msra.mxu0 %v116
    %137 = vmatprep.subr.bf16.mxu0 0
    %138 = vmatpush1.bf16.msra.mxu0 %v117
    %139 = vmatprep.subr.bf16.mxu0 0
    %140 = vmatpush1.bf16.msra.mxu0 %v118
    %141 = vmatprep.subr.bf16.mxu0 0
    %142 = vmatpush1.bf16.msra.mxu0 %v119
    %143 = vmatprep.subr.bf16.mxu0 0
    %144 = vmatpush1.bf16.msra.mxu0 %v120
    %145 = vmatprep.subr.bf16.mxu0 0
    %146 = vmatpush1.bf16.msra.mxu0 0
    %147 = vmatprep.subr.bf16.mxu0 0
    %148 = vmatpush1.bf16.msra.mxu0 0
    %149 = vmatprep.subr.bf16.mxu0 0
    %150 = vmatpush1.bf16.msra.mxu0 0
    %151 = vmatprep.subr.bf16.mxu0 0
    %152 = vmatpush1.bf16.msra.mxu0 0
    %153 = vmatprep.subr.bf16.mxu0 0
    %154 = vmatpush1.bf16.msra.mxu0 0
    %155 = vmatprep.subr.bf16.mxu0 0
    %156 = vmatpush1.bf16.msra.mxu0 0
    %157 = vmatprep.subr.bf16.mxu0 0
    %158 = vmatpush1.bf16.msra.mxu0 0
    %159 = vmatprep.subr.bf16.mxu0 0
    %160 = vmatpush1.bf16.msra.mxu0 0
    %161 = vmatprep.mubr.bf16.mxu0 0
    %162 = vmatmul.mubr.bf16.gmra.mrb[0].mxu0 %v79
    %v163 = vpop.f32.mrb[0].mxu0
    %v164 = vadd.f32 0.0, %v163
    %v165 = vpop.f32.mrb[0].mxu0
    %v166 = vpop.f32.mrb[0].mxu0
    %v167 = vadd.f32 0.0, %v166
    %v168 = vpop.f32.mrb[0].mxu0
    %169 = vdwg.mxu0
    %v170 = vadd.f32 %v57, %v164
    %v171 = vadd.f32 %v58, %v167
    %172 = vst [vmem:[#allocation2] sm:$0xff] %v170
    %173 = vst [vmem:[#allocation2 + $0x8] sm:$0xff] %v171
    // Predicated region
    $region26: #{tpu_custom_call.1} parent=1 // pred_check
      %p174 = pneg %p44
    $region27: #{tpu_custom_call.1} parent=1 // pred_check_branch
      %176 = sbr.rel (%p174) target = $region29
    $region28: #{tpu_custom_call.1} parent=1 // pred_region
      %v177 = vld [vmem:[#allocation2] sm:$0xff]
      %v178 = vld [vmem:[#allocation2 + $0x8] sm:$0xff]
      %v179 = vld [vmem:[%s2] sm:$0x1]
      %v181 = vlaneseq
      %v182 = vshrl.u32 %v181, 7
      %v183 = vsub.s32 0, %v182
      %v184 = vrot.slane %v179, %v183
      %v186 = vadd.f32 %v177, %v184
      %v187 = vadd.f32 %v178, %v184
      %188 = vst [vmem:[#allocation8] sm:$0xff] %v186
      %189 = vst [vmem:[#allocation8 + $0x8] sm:$0xff] %v187
    $region29: #{tpu_custom_call.1} parent=1 // pred_fallthru
      _
    // Predicated region
    $region30: #{tpu_custom_call.1} parent=1 // pred_check
      _
    $region31: #{tpu_custom_call.1} parent=1 // pred_check_branch
      %191 = sbr.rel (0) target = $region33
    $region32: #{tpu_custom_call.1} parent=1 // pred_region
      %s193 = ssub.s32 256, 256
      %194 = vsyncadd [#allocation5], %s193
      %s195 = sshll.u32 [#allocation8], 4
      %s196 = int_to_ptr.vmem [resolvable:$true] %s195
      %201 = dma.vmem_to_hbm [thread:$0]  %s196, 256, %s3, [#allocation5], 128, 128, 8
    $region33: #{tpu_custom_call.1} parent=1 // pred_fallthru
      _
    // Predicated region
    $region34: #{tpu_custom_call.1} parent=1 // pred_check
      _
    $region35: #{tpu_custom_call.1} parent=1 // pred_check_branch
      %203 = sbr.rel (0) target = $region37
    $region36: #{tpu_custom_call.1} parent=1 // pred_region
      %204 = dma.done [#allocation5], 256
    $region37: #{tpu_custom_call.1} parent=1 // pred_fallthru
      _
    %205 = vsyncpa [#allocation4], 1
    %206 = vsyncpa [#allocation7], 1
    %207 = vsyncpa [#allocation5], 1

</llo_original>
